<compile_context>
chip_gen: v5e
topology: v5e:2x2
jax: 0.10.0
libtpu: 0.0.40
codegen_flags: <defaults>
</compile_context>

<pallas_src>
import functools

import numpy as np
import jax
import jax.numpy as jnp
from jax.experimental import pallas as pl
from jax.experimental.pallas import tpu as pltpu

ENTMAX_N_ITER = 20   # bracket starts <= 1 -> 2^-20 tau error, below bf16 output precision


def _vmem_budgets():
    """(vmem_limit_bytes, tile_budget_bytes, row_tile_target) per TPU generation."""
    cap = 64 * 1024 * 1024
    try:
        cap = int(getattr(pltpu.get_tpu_info(), "vmem_capacity_bytes", cap))
    except Exception:
        pass
    if cap >= 128 * 1024 * 1024:          # v5e / v6e: 128 MiB physical VMEM
        return 100 * 2**20, 80 * 2**20, 512
    return 48 * 2**20, 30 * 2**20, 256    # v7x-safe (64 MiB physical)


_VMEM_LIMIT, _VMEM_TILE_BUDGET, _ROW_TILE_TARGET = _vmem_budgets()


# ----------------------------------------------------------------------------
# Pallas kernels
# ----------------------------------------------------------------------------
def _linear_kernel(x_ref, wt_ref, b_ref, o_ref):
    # bf16 MXU inputs, f32 accumulation.
    acc = jnp.dot(x_ref[...], wt_ref[...],
                  preferred_element_type=jnp.float32) + b_ref[...]
    o_ref[...] = acc.astype(o_ref.dtype)


def _ln_oproj_kernel(x_ref, g_ref, beta_ref, wt_ref, b_ref, o_ref):
    x = x_ref[...].astype(jnp.float32)          # attention output is bf16; stats in f32
    mean = jnp.mean(x, axis=-1, keepdims=True)
    xc = x - mean
    var = jnp.mean(xc * xc, axis=-1, keepdims=True)   # biased, like torch LayerNorm
    normed = xc * jax.lax.rsqrt(var + 1e-5) * g_ref[...] + beta_ref[...]
    acc = jnp.dot(normed.astype(jnp.bfloat16), wt_ref[...],
                  preferred_element_type=jnp.float32) + b_ref[...]
    o_ref[...] = acc.astype(o_ref.dtype)


def _span_entmax_attn_kernel(q_ref, k_ref, v_ref, mask_ref, alpha_ref, o_ref,
                             *, exp_is_two, transpose_out):
    # q/k/v blocks: (BH_T, W, hd) bf16; mask: (BH_T, 1, W) f32 (includes 1/sqrt(hd));
    # alpha: (BH_T, 1, 1) f32.
    q = q_ref[...]
    k = k_ref[...]
    v = v_ref[...]

    scores = jnp.einsum('bqd,bkd->bqk', q, k, preferred_element_type=jnp.float32)

    # AdaptiveSpan: soft mask (scale folded in) then normalize by the signed sum.
    scores = scores * mask_ref[...]
    denom = jnp.sum(scores, axis=-1, keepdims=True) + 1e-8
    scores = scores / denom                     # exact divide: denom can be ~0

    # entmax_bisect (alpha-entmax via bisection), per-head alpha.
    alpha = alpha_ref[...]
    am1 = alpha - 1.0
    X = scores * am1
    d = scores.shape[-1]
    max_val = jnp.max(X, axis=-1, keepdims=True)
    tau_lo0 = max_val - 1.0                                    # 1 ** (alpha-1)
    tau_hi0 = max_val - jnp.exp(am1 * jnp.log(1.0 / d))        # (1/d) ** (alpha-1)

    if exp_is_two:
        # alpha == 1.5 exactly -> exponent 1/(alpha-1) == 2: pure VPU multiplies.
        def p_fn(tau):
            t = jnp.maximum(X - tau, 0.0)
            return t * t
    else:
        inv_am1 = 1.0 / am1                                    # tiny tensor: exact
        def p_fn(tau):
            t = X - tau
            pos = t > 0.0
            safe = jnp.where(pos, t, 1.0)
            return jnp.where(pos, jnp.exp(inv_am1 * jnp.log(safe)), 0.0)

    # f(tau_lo0) >= 0 by construction, so the bracket update only needs f_m >= 0.
    def body(_, carry):
        tau_lo, dm = carry
        dm = dm * 0.5
        tau_m = tau_lo + dm
        f_m = jnp.sum(p_fn(tau_m), axis=-1, keepdims=True) - 1.0
        tau_lo = jnp.where(f_m >= 0.0, tau_m, tau_lo)
        return tau_lo, dm

    tau_lo, _ = jax.lax.fori_loop(0, ENTMAX_N_ITER, body, (tau_lo0, tau_hi0 - tau_lo0))
    p = p_fn(tau_lo)                                           # sum(p) >= 1 at tau_lo
    weights = (p * pl.reciprocal(jnp.sum(p, axis=-1, keepdims=True),
                                 approx=True)).astype(v.dtype)

    if transpose_out:
        # Lane-dense store for hd < 128: last stored dim is the window (128-multiple).
        out = jnp.einsum('bkd,bqk->bdq', v, weights, preferred_element_type=jnp.float32)
    else:
        # TODO(synk): hd < 128 with window not a 128-multiple falls back to masked
        # partial stores; production configs should use window % 128 == 0 or hd >= 128.
        out = jnp.einsum('bqk,bkd->bqd', weights, v, preferred_element_type=jnp.float32)
    o_ref[...] = out.astype(o_ref.dtype)


# ----------------------------------------------------------------------------
# Tiling helpers + pallas_call wrappers
# ----------------------------------------------------------------------------
def _row_tile(n, target):
    t = min(target, n)
    if t != n:
        t = max(8, (t // 8) * 8)
    return t


def _n_tile(din, dout, budget_bytes):
    """Output-dim tile for the linears: largest divisor of dout (a 128-multiple, or
    dout itself) whose double-buffered bf16 weight tile fits the budget."""
    def fits(t):
        return 2 * 2 * din * t <= budget_bytes   # 2 bufs x bf16
    if fits(dout) or dout % 128 != 0:
        return dout
    t = dout
    while t >= 128:
        if dout % t == 0 and fits(t):
            return t
        t -= 128
    return dout   # TODO(synk): add K-tiling with an f32 accumulator for huge din/dout


def _bh_tile(bh, window, hd, budget_bytes):
    """Largest divisor of BH (capped at BH//2 so the megacore-sharded axis keeps >=2
    steps) whose double-buffered bf16 q/k/v/out tiles plus ~6 live (BH_T,W,W) f32
    entmax intermediates fit the budget."""
    def cost(t):
        io = 2 * t * window * hd * (3 * 2 + 2)   # 2 bufs: bf16 q,k,v + bf16 out
        inter = 6 * t * window * window * 4      # scores/X/t/log/exp/p live f32 slabs
        return io + inter
    cap = bh // 2 if bh >= 2 else bh
    for t in range(cap, 0, -1):
        if bh % t == 0 and cost(t) <= budget_bytes:
            return t
    return 1


def pallas_linear(x2d, wt, b, out_dtype):
    """y = x @ wt + b; x bf16, wt pre-transposed & pre-cast bf16 (din, dout)."""
    n, din = x2d.shape
    dout = wt.shape[1]
    tm = _row_tile(n, _ROW_TILE_TARGET)
    tn = _n_tile(din, dout, _VMEM_TILE_BUDGET // 3)
    return pl.pallas_call(
        _linear_kernel,
        out_shape=jax.ShapeDtypeStruct((n, dout), out_dtype),
        grid=(pl.cdiv(n, tm), dout // tn),
        in_specs=[pl.BlockSpec((tm, din), lambda i, j: (i, 0)),
                  pl.BlockSpec((din, tn), lambda i, j: (0, j)),
                  pl.BlockSpec((1, tn), lambda i, j: (0, j))],
        out_specs=pl.BlockSpec((tm, tn), lambda i, j: (i, j)),
        compiler_params=pltpu.CompilerParams(
            dimension_semantics=("parallel", "parallel"),
            vmem_limit_bytes=_VMEM_LIMIT),
    )(x2d, wt, b.reshape(1, dout).astype(jnp.float32))


def pallas_ln_oproj(x2d, gamma, beta, w_o_t, b_o):
    n, d = x2d.shape
    tm = _row_tile(n, _ROW_TILE_TARGET)
    tn = _n_tile(d, d, _VMEM_TILE_BUDGET // 3)
    return pl.pallas_call(
        _ln_oproj_kernel,
        out_shape=jax.ShapeDtypeStruct((n, d), jnp.float32),
        grid=(pl.cdiv(n, tm), d // tn),
        in_specs=[pl.BlockSpec((tm, d), lambda i, j: (i, 0)),
                  pl.BlockSpec((1, d), lambda i, j: (0, 0)),
                  pl.BlockSpec((1, d), lambda i, j: (0, 0)),
                  pl.BlockSpec((d, tn), lambda i, j: (0, j)),
                  pl.BlockSpec((1, tn), lambda i, j: (0, j))],
        out_specs=pl.BlockSpec((tm, tn), lambda i, j: (i, j)),
        compiler_params=pltpu.CompilerParams(
            dimension_semantics=("parallel", "parallel"),
            vmem_limit_bytes=_VMEM_LIMIT),
    )(x2d, gamma.reshape(1, d), beta.reshape(1, d), w_o_t, b_o.reshape(1, d))


def pallas_span_entmax_attention(q_bh, k_bh, v_bh, span_mask, alpha_bh, window,
                                 exp_is_two=False):
    bh, seq, hd = q_bh.shape
    n_chunks = seq // window
    bh_t = _bh_tile(bh, window, hd, _VMEM_TILE_BUDGET)
    # Lane-dense output layout when hd < 128 lanes and window is a 128-multiple.
    transpose_out = (hd % 128 != 0) and (window % 128 == 0)

    qkv_blk = pl.BlockSpec((bh_t, window, hd), lambda b, c: (b, c, 0))
    if transpose_out:
        out_shape = jax.ShapeDtypeStruct((bh, hd, seq), jnp.bfloat16)
        out_spec = pl.BlockSpec((bh_t, hd, window), lambda b, c: (b, 0, c))
    else:
        out_shape = jax.ShapeDtypeStruct((bh, seq, hd), jnp.bfloat16)
        out_spec = qkv_blk

    kernel = functools.partial(_span_entmax_attn_kernel,
                               exp_is_two=exp_is_two, transpose_out=transpose_out)
    out = pl.pallas_call(
        kernel,
        out_shape=out_shape,
        grid=(bh // bh_t, n_chunks),               # chunk axis innermost: mask/alpha resident
        in_specs=[qkv_blk, qkv_blk, qkv_blk,
                  pl.BlockSpec((bh_t, 1, window), lambda b, c: (b, 0, 0)),
                  pl.BlockSpec((bh_t, 1, 1), lambda b, c: (b, 0, 0))],
        out_specs=out_spec,
        compiler_params=pltpu.CompilerParams(
            dimension_semantics=("parallel", "parallel"),   # no cross-window accumulation
            vmem_limit_bytes=_VMEM_LIMIT),
    )(q_bh, k_bh, v_bh, span_mask, alpha_bh)
    return out, transpose_out


def _alpha_is_three_halves(alpha):
    """Static check (concrete values only) that every head's alpha is exactly 1.5."""
    try:
        return bool(np.all(np.asarray(alpha) == 1.5))
    except Exception:           # traced under jit -> use the general entmax path
        return False


# ----------------------------------------------------------------------------
# MixAdaptiveAttention forward (glue in plain JAX, hot path in Pallas)
# ----------------------------------------------------------------------------
def mix_adaptive_attention_forward(hidden_states, params, cfg,
                                   attention_mask=None, output_attentions=False):
    B, L, D = hidden_states.shape
    H = cfg['num_heads']
    hd = D // H
    window = cfg['attention_window']
    span_cfg = cfg['span']
    S = span_cfg['attn_span']
    ramp = span_cfg['adapt_span_ramp']

    # TODO(synk): ragged last window (L % window != 0) and K < attn_span mask
    # slicing are not exercised here; configuration keeps K == attn_span == window.
    assert L % window == 0 and S == window

    # adaptive_span.clamp_param()
    cur = jnp.clip(params['span_current_val'], 0.0, 1.0)        # (H,1,1)

    # qkv projection (Pallas): bf16 activations cast once here; weights are
    # pre-transposed / pre-cast bf16 parameters (no per-step XLA transpose).
    x2d = hidden_states.reshape(B * L, D).astype(jnp.bfloat16)
    qkv = pallas_linear(x2d, params['w_qkv_t'], params['b_qkv'], out_dtype=jnp.bfloat16)
    qkv = qkv.reshape(B, L, H, 3 * hd).transpose(0, 2, 1, 3)    # (B,H,L,3hd)
    # TODO(synk): for hd % 128 == 0 this head split/transpose can be fused into the
    # attention in_specs via column offsets into the (B*L, 3D) qkv; left to XLA for hd<128.
    q, k, v = qkv[..., :hd], qkv[..., hd:2 * hd], qkv[..., 2 * hd:]
    # adaptive_span.trim_memory(q, k, v, None): no-op (adapt_span_cache=False).

    # AdaptiveMask soft span mask (H, S); fold the 1/sqrt(hd) score scale into it.
    template = jnp.linspace(1 - S, 0, S).astype(jnp.float32)
    m = jnp.clip((template[None, None, :] + cur * S) / ramp + 1.0, 0.0, 1.0)[:, 0, :]
    m_scaled = m * (1.0 / (hd ** 0.5))

    BH = B * H
    q_bh = q.reshape(BH, L, hd)
    k_bh = k.reshape(BH, L, hd)
    v_bh = v.reshape(BH, L, hd)
    span_mask = jnp.tile(m_scaled, (B, 1)).reshape(BH, 1, S)                   # (BH,1,S)
    alpha_bh = jnp.tile(params['alpha'][:, None], (B, 1)).reshape(BH, 1, 1)
    alpha_bh = alpha_bh.astype(jnp.float32)

    exp_is_two = _alpha_is_three_halves(params['alpha'])
    attn, transposed = pallas_span_entmax_attention(
        q_bh, k_bh, v_bh, span_mask, alpha_bh, window, exp_is_two=exp_is_two)

    if transposed:   # attn: (BH, hd, L)
        out2d = attn.reshape(B, H, hd, L).transpose(0, 3, 1, 2).reshape(B * L, D)
    else:            # attn: (BH, L, hd)
        out2d = attn.reshape(B, H, L, hd).transpose(0, 2, 1, 3).reshape(B * L, D)

    out = pallas_ln_oproj(out2d, params['gamma'], params['beta'],
                          params['w_o_t'], params['b_o']).reshape(B, L, D)

    outputs = (out,)
    if output_attentions:
        outputs += (None,)
    return outputs


# ----------------------------------------------------------------------------
# Pure-JAX reference (mirrors the PyTorch math; matmul inputs/attention output
# rounded to bf16 to match the kernel's numerics so the check validates Pallas)
# ----------------------------------------------------------------------------
def _entmax_bisect_ref(X, alpha, n_iter=50):
    am1 = alpha - 1.0
    Xs = X * am1
    d = X.shape[-1]
    max_val = jnp.max(Xs, axis=-1, keepdims=True)
    tau_lo = max_val - 1.0
    tau_hi = max_val - (1.0 / d) ** am1

    def p(tau):
        return jnp.clip(Xs - tau, 0.0, None) ** (1.0 / am1)

    f_lo = p(tau_lo).sum(-1, keepdims=True) - 1.0
    dm = tau_hi - tau_lo
    p_m = None
    for _ in range(n_iter):
        dm = dm / 2
        tau_m = tau_lo + dm
        p_m = p(tau_m)
        f_m = p_m.sum(-1, keepdims=True) - 1.0
        tau_lo = jnp.where(f_m * f_lo >= 0, tau_m, tau_lo)
    return p_m / p_m.sum(-1, keepdims=True)


def reference_forward(x, p, cfg):
    bf16 = jnp.bfloat16
    B, L, D = x.shape
    H = cfg['num_heads']
    hd = D // H
    window = cfg['attention_window']
    S = cfg['span']['attn_span']
    ramp = cfg['span']['adapt_span_ramp']

    cur = jnp.clip(p['span_current_val'], 0.0, 1.0)
    qkv = (jnp.dot(x.reshape(B * L, D).astype(bf16), p['w_qkv'].T.astype(bf16),
                   preferred_element_type=jnp.float32) + p['b_qkv']).astype(bf16)
    qkv = qkv.reshape(B, L, H, 3 * hd).transpose(0, 2, 1, 3)
    q, k, v = qkv[..., :hd], qkv[..., hd:2 * hd], qkv[..., 2 * hd:]
    alpha = p['alpha'].reshape(1, H, 1, 1)

    template = jnp.linspace(1 - S, 0, S).astype(jnp.float32)
    mask_full = jnp.clip((template[None, None, :] + cur * S) / ramp + 1.0, 0.0, 1.0)

    out = jnp.zeros(q.shape, jnp.float32)
    for start in range(0, L, window):
        end = min(start + window, L)
        qc, kc, vc = q[:, :, start:end], k[:, :, start:end], v[:, :, start:end]
        scores = jnp.einsum('bhqd,bhkd->bhqk', qc, kc,
                            preferred_element_type=jnp.float32) / hd ** 0.5
        Kc = scores.shape[-1]
        s = scores * mask_full[None, :, :, -Kc:]
        s = s / (s.sum(-1, keepdims=True) + 1e-8)
        w = _entmax_bisect_ref(s, alpha)
        chunk = jnp.einsum('bhqk,bhkd->bhqd', w.astype(bf16), vc,
                           preferred_element_type=jnp.float32)
        out = out.at[:, :, start:end].set(chunk.astype(bf16).astype(jnp.float32))

    out = out.transpose(0, 2, 1, 3).reshape(B, L, D)
    mean = out.mean(-1, keepdims=True)
    var = ((out - mean) ** 2).mean(-1, keepdims=True)
    out = (out - mean) / jnp.sqrt(var + 1e-5) * p['gamma'] + p['beta']
    return (jnp.dot(out.reshape(B * L, D).astype(bf16), p['w_o'].T.astype(bf16),
                    preferred_element_type=jnp.float32) + p['b_o']).reshape(B, L, D)


# ----------------------------------------------------------------------------
if __name__ == "__main__":
    B, L, H, hd, window = 2, 16, 4, 8, 8
    D = H * hd

    keys = jax.random.split(jax.random.PRNGKey(0), 7)
    x = jax.random.normal(keys[0], (B, L, D), jnp.float32)

    params = dict(
        w_qkv=0.05 * jax.random.normal(keys[1], (3 * D, D), jnp.float32),
        b_qkv=0.02 * jax.random.normal(keys[2], (3 * D,), jnp.float32),
        w_o=0.05 * jax.random.normal(keys[3], (D, D), jnp.float32),
        b_o=0.02 * jax.random.normal(keys[4], (D,), jnp.float32),
        gamma=jnp.ones((D,), jnp.float32),
        beta=jnp.zeros((D,), jnp.float32),
        alpha=1.5 + 0.05 * jax.random.normal(keys[5], (H,), jnp.float32),
        span_current_val=jnp.full((H, 1, 1), 0.3, jnp.float32),
    )
    # Hoisted weight prep (done once, outside the forward): transpose + bf16 cast.
    params['w_qkv_t'] = params['w_qkv'].T.astype(jnp.bfloat16)
    params['w_o_t'] = params['w_o'].T.astype(jnp.bfloat16)

    cfg = dict(
        num_heads=H,
        attention_window=window,
        span=dict(attn_span=window, adapt_span_loss=0.0, adapt_span_ramp=4,
                  adapt_span_init=0.3, adapt_span_cache=False),
    )

    out = mix_adaptive_attention_forward(x, params, cfg)[0]
    out = jax.block_until_ready(out)
    assert out.shape == (B, L, D)
    assert bool(jnp.all(jnp.isfinite(out)))

    ref = jax.block_until_ready(reference_forward(x, params, cfg))
    np.testing.assert_allclose(np.asarray(out), np.asarray(ref),
                               rtol=5e-2, atol=1e-2)

    print("KERNEL_OK")
</pallas_src>

<mosaic_0001>
module attributes {stable_mosaic.version = 11 : i64} {
  func.func @_linear_kernel(%arg0: i32, %arg1: i32, %arg2: memref<32x32xbf16, #tpu.memory_space<vmem>>, %arg3: memref<32x96xbf16, #tpu.memory_space<vmem>>, %arg4: memref<1x96xf32, #tpu.memory_space<vmem>>, %arg5: memref<32x96xbf16, #tpu.memory_space<vmem>>) attributes {dimension_semantics = [#tpu.dimension_semantics<parallel>, #tpu.dimension_semantics<parallel>], iteration_bounds = array<i64: 1, 1>, scalar_prefetch = 0 : i64, scratch_operands = 0 : i64, tpu.core_type = #tpu.core_type<tc>, window_params = [{transform_indices = @transform_0, window_bounds = array<i64: 32, 32>}, {transform_indices = @transform_1, window_bounds = array<i64: 32, 96>}, {transform_indices = @transform_2, window_bounds = array<i64: 1, 96>}, {transform_indices = @transform_3, window_bounds = array<i64: 32, 96>}]} {
    %c0 = arith.constant 0 : index
    %c0_0 = arith.constant 0 : index
    %0 = vector.load %arg2[%c0, %c0_0] : memref<32x32xbf16, #tpu.memory_space<vmem>>, vector<32x32xbf16>
    %c0_1 = arith.constant 0 : index
    %c0_2 = arith.constant 0 : index
    %1 = vector.load %arg3[%c0_1, %c0_2] : memref<32x96xbf16, #tpu.memory_space<vmem>>, vector<32x96xbf16>
    %cst = arith.constant dense<0.000000e+00> : vector<32x96xf32>
    %2 = tpu.matmul %0, %1, %cst {dimension_numbers = #tpu.dot_dimension_numbers<[1], [0], [0], [1], [0, 0, 1, 1], [], []>} : vector<32x32xbf16>, vector<32x96xbf16>, vector<32x96xf32> -> vector<32x96xf32>
    %c0_3 = arith.constant 0 : index
    %c0_4 = arith.constant 0 : index
    %3 = vector.load %arg4[%c0_3, %c0_4] : memref<1x96xf32, #tpu.memory_space<vmem>>, vector<1x96xf32>
    %4 = vector.broadcast %3 : vector<1x96xf32> to vector<32x96xf32>
    %5 = arith.addf %2, %4 : vector<32x96xf32>
    %6 = arith.truncf %5 : vector<32x96xf32> to vector<32x96xbf16>
    %c0_5 = arith.constant 0 : index
    %c0_6 = arith.constant 0 : index
    %7 = vector.load %arg5[%c0_5, %c0_6] : memref<32x96xbf16, #tpu.memory_space<vmem>>, vector<32x96xbf16>
    tpu.vector_store %arg5[%c0_5, %c0_6], %6 {strides = array<i32>} : memref<32x96xbf16, #tpu.memory_space<vmem>>, vector<32x96xbf16>,
    return
  }
  func.func @transform_0(%arg0: i32, %arg1: i32) -> (i32, i32) {
    %c0_i32 = arith.constant 0 : i32
    %c0_i32_0 = arith.constant 0 : i32
    return %arg0, %c0_i32 : i32, i32
  }
  func.func @transform_1(%arg0: i32, %arg1: i32) -> (i32, i32) {
    %c0_i32 = arith.constant 0 : i32
    %c0_i32_0 = arith.constant 0 : i32
    return %c0_i32, %arg1 : i32, i32
  }
  func.func @transform_2(%arg0: i32, %arg1: i32) -> (i32, i32) {
    %c0_i32 = arith.constant 0 : i32
    %c0_i32_0 = arith.constant 0 : i32
    return %c0_i32, %arg1 : i32, i32
  }
  func.func @transform_3(%arg0: i32, %arg1: i32) -> (i32, i32) {
    %c0_i32 = arith.constant 0 : i32
    return %arg0, %arg1 : i32, i32
  }
}

</mosaic_0001>

<llo_original>
// kernel: tpu_custom_call.1
$region0: #{tpu_custom_call.1}
  #allocation0 [shape = 'u32[]', space=smem, size = 0x4, offset = 0x4, fixed_abs, tag = 'smem constant byte address 0x4 - core index']
  #allocation1 [shape = 'u32[72,128]{1,0:T(1,128)}', space=vmem, size = 0x9000, scoped, tag = 'internal scratch']
  %s0 = inlined_call_operand.hbm [shape: bf16[32,32], index: 0, kind: input, shape index: {}]
  %s1 = inlined_call_operand.hbm [shape: bf16[32,96], index: 1, kind: input, shape index: {}]
  %s2 = inlined_call_operand.vmem [shape: f32[1,96], index: 2, kind: input, shape index: {}]
  %s3 = inlined_call_operand.hbm [shape: bf16[32,96], index: 3, kind: output, shape index: {}]
  %s4 = sld [smem:[#allocation0]]
  $region30: #{tpu_custom_call.1} parent=0
    _
  %s6 = ssub.s32 1, %s4
  %s7 = scalar_select 0, %s6, %s4
  $region1: #{tpu_custom_call.1} parent=0
    #allocation2 [shape = 'u8[8192]{0}', space=vmem, size = 0x2000, scoped, tag = 'input window, operand 0, single buffered']
    #allocation3 [shape = 's32[1]{0}', space=sflag, size = 0x4, scoped, tag = 'scoped memory for tpu_custom_call.1']
    #allocation4 [shape = 's32[1]{0}', space=sflag, size = 0x4, scoped, tag = 'scoped memory for tpu_custom_call.1']
    #allocation5 [shape = 'u8[8192]{0}', space=vmem, size = 0x2000, scoped, tag = 'input window, operand 1, single buffered']
    #allocation6 [shape = 's32[1]{0}', space=sflag, size = 0x4, scoped, tag = 'scoped memory for tpu_custom_call.1']
    #allocation7 [shape = 'u8[8192]{0}', space=vmem, size = 0x2000, scoped, tag = 'output window, operand 0, single buffered']
    %8 = vsyncpa [#allocation3], 0
    %9 = vsyncpa [#allocation6], 0
    %10 = vsyncpa [#allocation4], 0
    // Predicated region
    $region2: #{tpu_custom_call.1} parent=1 // pred_check
      _
    $region3: #{tpu_custom_call.1} parent=1 // pred_check_branch
      %12 = sbr.rel (0) target = $region5
    $region4: #{tpu_custom_call.1} parent=1 // pred_region
      %14 = vsyncadd [#allocation3], 0
      %s15 = sshll.u32 %s0, 4
      %s16 = int_to_ptr.hbm [resolvable:$true] %s15
      %s17 = sshll.u32 [#allocation2], 4
      %s18 = int_to_ptr.vmem [resolvable:$true] %s17
      %23 = dma.hbm_to_vmem [thread:$0]  %s16, 256, %s18, [#allocation3], 64, 64, 4
    $region5: #{tpu_custom_call.1} parent=1 // pred_fallthru
      _
    // Predicated region
    $region6: #{tpu_custom_call.1} parent=1 // pred_check
      _
    $region7: #{tpu_custom_call.1} parent=1 // pred_check_branch
      %25 = sbr.rel (0) target = $region9
    $region8: #{tpu_custom_call.1} parent=1 // pred_region
      %27 = vsyncadd [#allocation6], 0
      %s28 = sshll.u32 %s1, 4
      %s29 = int_to_ptr.hbm [resolvable:$true] %s28
      %s30 = sshll.u32 [#allocation5], 4
      %s31 = int_to_ptr.vmem [resolvable:$true] %s30
      %36 = dma.hbm_to_vmem [thread:$0]  %s29, 256, %s31, [#allocation6], 64, 64, 4
    $region9: #{tpu_custom_call.1} parent=1 // pred_fallthru
      _
    // Predicated region
    $region10: #{tpu_custom_call.1} parent=1 // pred_check
      _
    $region11: #{tpu_custom_call.1} parent=1 // pred_check_branch
      %38 = sbr.rel (0) target = $region13
    $region12: #{tpu_custom_call.1} parent=1 // pred_region
      _
    $region13: #{tpu_custom_call.1} parent=1 // pred_fallthru
      _
    // Predicated region
    $region14: #{tpu_custom_call.1} parent=1 // pred_check
      _
    $region15: #{tpu_custom_call.1} parent=1 // pred_check_branch
      %40 = sbr.rel (0) target = $region17
    $region16: #{tpu_custom_call.1} parent=1 // pred_region
      %42 = dma.done [#allocation3], 256
    $region17: #{tpu_custom_call.1} parent=1 // pred_fallthru
      _
    // Predicated region
    $region18: #{tpu_custom_call.1} parent=1 // pred_check
      _
    $region19: #{tpu_custom_call.1} parent=1 // pred_check_branch
      %44 = sbr.rel (0) target = $region21
    $region20: #{tpu_custom_call.1} parent=1 // pred_region
      %46 = dma.done [#allocation6], 256
    $region21: #{tpu_custom_call.1} parent=1 // pred_fallthru
      _
    %v48 = vld [vmem:[#allocation2] sm:$0xf]
    %v49 = vld [vmem:[#allocation2 + $0x4] sm:$0xf]
    %v50 = vld [vmem:[#allocation2 + $0x8] sm:$0xf]
    %v51 = vld [vmem:[#allocation2 + $0xc] sm:$0xf]
    %v52 = vld [vmem:[#allocation5] sm:$0xf]
    %v53 = vld [vmem:[#allocation5 + $0x4] sm:$0xf]
    %v54 = vld [vmem:[#allocation5 + $0x8] sm:$0xf]
    %v55 = vld [vmem:[#allocation5 + $0xc] sm:$0xf]
    %v56 = vld [vmem:[%s2] sm:$0x1]
    %v58 = vperm.slane %v56, 0
    %v64 = vunpack.c.l.b16 %v48
    %v65 = vunpack.c.l.b16 %v49
    %v66 = vunpack.c.l.b16 %v50
    %v67 = vunpack.c.l.b16 %v51
    %v68 = vpack.c.b16 %v65, %v64
    %v69 = vpack.c.b16 %v67, %v66
    %v74 = vunpack.c.l.b16 %v52
    %v75 = vunpack.c.l.b16 %v53
    %v76 = vunpack.c.l.b16 %v54
    %v77 = vunpack.c.l.b16 %v55
    %v78 = vpack.c.b16 %v75, %v74
    %v79 = vpack.c.b16 %v77, %v76
    %vm82 = vcmask 261120
    %v84 = vsel %vm82, %v68, 0
    %v87 = vsel %vm82, %v69, 0
    %89 = vmatpush.bf16.msra.mxu0 0
    %90 = vmatpush.bf16.msra.mxu0 0
    %91 = vmatpush.bf16.msra.mxu0 0
    %92 = vmatpush.bf16.msra.mxu0 0
    %93 = vmatpush.bf16.msra.mxu0 0
    %94 = vmatpush.bf16.msra.mxu0 0
    %95 = vmatpush.bf16.msra.mxu0 %v79
    %96 = vmatpush.bf16.msra.mxu0 %v78
    %97 = vmatmul.bf16.gmra.mxu0 %v84
    %v98 = vpop.f32.mrf.mxu0
    %v99 = vadd.f32 %v58, %v98
    %v100 = vpop.f32.mrf.mxu0
    %v101 = vadd.f32 %v58, %v100
    %102 = vmatmul.bf16.gmra.mxu0 %v87
    %v103 = vpop.f32.mrf.mxu0
    %v104 = vadd.f32 %v58, %v103
    %v105 = vpop.f32.mrf.mxu0
    %v106 = vadd.f32 %v58, %v105
    %107 = vdwg.mxu0
    %v108 = vpack.c.bf16 %v99, %v99
    %v109 = vpack.c.bf16 %v101, %v101
    %v110 = vpack.c.bf16 %v104, %v104
    %v111 = vpack.c.bf16 %v106, %v106
    %vm112 = vcmask 781312
    %113 = vst.msk [vmem:[#allocation7] sm:$0xf] %vm112, %v108
    %114 = vst.msk [vmem:[#allocation7 + $0x4] sm:$0xf] %vm112, %v109
    %115 = vst.msk [vmem:[#allocation7 + $0x8] sm:$0xf] %vm112, %v110
    %116 = vst.msk [vmem:[#allocation7 + $0xc] sm:$0xf] %vm112, %v111
    // Predicated region
    $region22: #{tpu_custom_call.1} parent=1 // pred_check
      _
    $region23: #{tpu_custom_call.1} parent=1 // pred_check_branch
      %118 = sbr.rel (0) target = $region25
    $region24: #{tpu_custom_call.1} parent=1 // pred_region
      %120 = vsyncadd [#allocation4], 0
      %s121 = sshll.u32 [#allocation7], 4
      %s122 = int_to_ptr.vmem [resolvable:$true] %s121
      %s123 = sshll.u32 %s3, 4
      %s124 = int_to_ptr.hbm [resolvable:$true] %s123
      %129 = dma.vmem_to_hbm [thread:$0]  %s122, 256, %s124, [#allocation4], 64, 64, 4
    $region25: #{tpu_custom_call.1} parent=1 // pred_fallthru
      _
    // Predicated region
    $region26: #{tpu_custom_call.1} parent=1 // pred_check
      _
    $region27: #{tpu_custom_call.1} parent=1 // pred_check_branch
      %131 = sbr.rel (0) target = $region29
    $region28: #{tpu_custom_call.1} parent=1 // pred_region
      %133 = dma.done [#allocation4], 256
    $region29: #{tpu_custom_call.1} parent=1 // pred_fallthru
      _
    %134 = vsyncpa [#allocation3], 1
    %135 = vsyncpa [#allocation6], 1
    %136 = vsyncpa [#allocation4], 1

</llo_original>
